<compile_context>
chip_gen: v5e
topology: v5e:2x2
jax: 0.10.0
libtpu: 0.0.40
codegen_flags: <defaults>
</compile_context>

<pallas_src>
import functools

import jax
import jax.numpy as jnp
from jax.experimental import pallas as pl
from jax.experimental.pallas import tpu as pltpu


def critic_kernel(x_ref, w_in_ref, whh_ref, wout_t_ref, bias_ref, out_ref,
                  *, batch_pad, seq_len):
    PB = batch_pad
    T = seq_len
    B, V = out_ref.shape

    b1 = bias_ref[0:1, :]                        # (1, H)
    brnn = bias_ref[1:2, :]                      # (1, H)

    # ---- single fused MXU projection (one weight push for W1 and W_ih together) ----
    # x_ref is block-diagonal [[init_state, 0], [0, actions_t]], so
    #   rows 0:PB            -> init_state @ W1
    #   rows (t+1)PB:(t+2)PB -> actions[t] @ W_ih
    xw = jnp.dot(x_ref[...], w_in_ref[...],
                 preferred_element_type=jnp.float32)          # ((T+1)*PB, H)

    # ---- state2hidden1 + ReLU: initial hidden state (kept in vregs) ----
    h = jnp.maximum(xw[0:PB, :] + b1, 0.0)                    # (PB, H)

    # Recurrent input bias added in ONE VPU pass, off the serial chain.
    xw_rnn = xw[PB:, :] + brnn                                # (T*PB, H)

    # ---- tanh RNN recurrence (nn.RNN default nonlinearity='tanh') ----
    # W_hh read once -> loop-invariant MXU RHS; T static -> fully unrolled.
    whh = whh_ref[...]
    for t in range(T):
        x_t = xw_rnn[t * PB:(t + 1) * PB, :]                  # full 8-sublane tile
        h = jnp.tanh(x_t + jnp.dot(h, whh, preferred_element_type=jnp.float32))

    # ---- head: ReLU(h_n) @ W_out + b_out, kept off the MXU (V is tiny) ----
    h = jnp.maximum(h, 0.0)
    wout_t = wout_t_ref[...]                                  # (V, H)
    cols = [jnp.sum(h * wout_t[v:v + 1, :], axis=-1, keepdims=True)   # VPU mul + XLU reduce
            for v in range(V)]
    value = cols[0] if V == 1 else jnp.concatenate(cols, axis=-1)     # (PB, V)
    out_ref[...] = value[0:B, :] + bias_ref[2:3, 0:V]


def pack_params(params):
    """Pack raw parameters into the kernel's fused operand layout (done once)."""
    H = params["whh"].shape[0]
    V = params["wout"].shape[1]
    w_in = jnp.concatenate([params["w1"], params["wih"]], axis=0)      # (S+A, H)
    k = w_in.shape[0]
    k_pad = ((k + 7) // 8) * 8                                         # tile-align K dim
    w_in = jnp.pad(w_in, ((0, k_pad - k), (0, 0)))                     # (K_pad, H)
    bout_pad = jnp.pad(params["bout"], ((0, 0), (0, H - V)))           # (1, H)
    bias = jnp.concatenate([params["b1"], params["brnn"], bout_pad], axis=0)  # (3, H)
    return {"w_in": w_in, "whh": params["whh"],
            "wout_t": params["wout"].T, "bias": bias}


def critic_forward(init_state, actions, packed):
    B, S = init_state.shape
    T, Bb, A = actions.shape
    assert Bb == B
    V = packed["wout_t"].shape[0]
    K_pad = packed["w_in"].shape[0]
    assert K_pad >= S + A
    PB = max(8, ((B + 7) // 8) * 8)          # pad batch rows to a multiple of 8 sublanes

    # Block-diagonal fused input: one MXU weight push of [W1; W_ih] covers everything.
    x = jnp.zeros(((T + 1) * PB, K_pad), jnp.float32)
    x = x.at[0:B, 0:S].set(init_state.astype(jnp.float32))
    act = jnp.zeros((T, PB, A), jnp.float32).at[:, 0:B, :].set(actions.astype(jnp.float32))
    x = x.at[PB:, S:S + A].set(act.reshape(T * PB, A))

    kernel = functools.partial(critic_kernel, batch_pad=PB, seq_len=T)
    vmem = pl.BlockSpec(memory_space=pltpu.MemorySpace.VMEM)
    # NOTE: gridless on purpose (small B; v5e/v6e have one TC so a grid only adds ~0.35 us/step
    # of overhead).  For large B on v7x, shard a grid over B with
    # dimension_semantics=("parallel",) and constant index_maps for the weight operands.
    return pl.pallas_call(
        kernel,
        out_shape=jax.ShapeDtypeStruct((B, V), jnp.float32),
        in_specs=[vmem] * 5,
        out_specs=vmem,
    )(x, packed["w_in"], packed["whh"], packed["wout_t"], packed["bias"])


def make_params(key, state_size, action_size, value_size, hidden_size):
    ks = jax.random.split(key, 7)
    scale = 0.1
    # Stored as (in, out); PyTorch stores (out, in). b_rnn = b_ih + b_hh folded together.
    return {
        "w1":   scale * jax.random.normal(ks[0], (state_size, hidden_size), jnp.float32),
        "b1":   scale * jax.random.normal(ks[1], (1, hidden_size), jnp.float32),
        "wih":  scale * jax.random.normal(ks[2], (action_size, hidden_size), jnp.float32),
        "whh":  scale * jax.random.normal(ks[3], (hidden_size, hidden_size), jnp.float32),
        "brnn": scale * jax.random.normal(ks[4], (1, hidden_size), jnp.float32),
        "wout": scale * jax.random.normal(ks[5], (hidden_size, value_size), jnp.float32),
        "bout": scale * jax.random.normal(ks[6], (1, value_size), jnp.float32),
    }


def critic_reference(init_state, actions, params):
    """Pure-JAX reference matching PyTorch semantics."""
    h = jnp.maximum(init_state @ params["w1"] + params["b1"], 0.0)
    T = actions.shape[0]
    for t in range(T):
        h = jnp.tanh(actions[t] @ params["wih"] + h @ params["whh"] + params["brnn"])
    h = jnp.maximum(h, 0.0)
    return h @ params["wout"] + params["bout"]


if __name__ == "__main__":
    # Small shapes consistent with the module's forward (hidden_size = module default 128).
    B, T = 2, 8
    state_size, action_size, value_size, hidden_size = 8, 4, 1, 128

    key = jax.random.PRNGKey(0)
    k_state, k_actions, k_params = jax.random.split(key, 3)

    init_state = jax.random.normal(k_state, (B, state_size), jnp.float32)
    actions = jax.random.normal(k_actions, (T, B, action_size), jnp.float32)
    params = make_params(k_params, state_size, action_size, value_size, hidden_size)
    packed = pack_params(params)

    fwd = jax.jit(critic_forward)
    value = jax.block_until_ready(fwd(init_state, actions, packed))

    ref = critic_reference(init_state, actions, params)
    assert value.shape == (B, value_size)
    assert jnp.allclose(value, ref, atol=1e-4, rtol=1e-4), \
        f"max abs err = {jnp.max(jnp.abs(value - ref))}"

    print("KERNEL_OK")
</pallas_src>

<mosaic_0001>
module attributes {stable_mosaic.version = 11 : i64} {
  func.func @critic_kernel(%arg0: memref<72x16xf32, #tpu.memory_space<vmem>>, %arg1: memref<16x128xf32, #tpu.memory_space<vmem>>, %arg2: memref<128x128xf32, #tpu.memory_space<vmem>>, %arg3: memref<1x128xf32, #tpu.memory_space<vmem>>, %arg4: memref<3x128xf32, #tpu.memory_space<vmem>>, %arg5: memref<2x1xf32, #tpu.memory_space<vmem>>) attributes {dimension_semantics = [], scalar_prefetch = 0 : i64, scratch_operands = 0 : i64, tpu.core_type = #tpu.core_type<tc>} {
    %c0 = arith.constant 0 : index
    %c0_0 = arith.constant 0 : index
    %0 = vector.load %arg4[%c0, %c0_0] : memref<3x128xf32, #tpu.memory_space<vmem>>, vector<1x128xf32>
    %c1 = arith.constant 1 : index
    %c0_1 = arith.constant 0 : index
    %1 = vector.load %arg4[%c1, %c0_1] : memref<3x128xf32, #tpu.memory_space<vmem>>, vector<1x128xf32>
    %c0_2 = arith.constant 0 : index
    %c0_3 = arith.constant 0 : index
    %2 = vector.load %arg0[%c0_2, %c0_3] : memref<72x16xf32, #tpu.memory_space<vmem>>, vector<72x16xf32>
    %c0_4 = arith.constant 0 : index
    %c0_5 = arith.constant 0 : index
    %3 = vector.load %arg1[%c0_4, %c0_5] : memref<16x128xf32, #tpu.memory_space<vmem>>, vector<16x128xf32>
    %cst = arith.constant dense<0.000000e+00> : vector<72x128xf32>
    %4 = tpu.matmul %2, %3, %cst {dimension_numbers = #tpu.dot_dimension_numbers<[1], [0], [0], [1], [0, 0, 1, 1], [], []>} : vector<72x16xf32>, vector<16x128xf32>, vector<72x128xf32> -> vector<72x128xf32>
    %5 = vector.extract_strided_slice %4 {offsets = [0, 0], sizes = [8, 128], strides = [1, 1]} : vector<72x128xf32> to vector<8x128xf32>
    %6 = vector.broadcast %0 : vector<1x128xf32> to vector<8x128xf32>
    %7 = arith.addf %5, %6 : vector<8x128xf32>
    %cst_6 = arith.constant 0.000000e+00 : f32
    %8 = vector.broadcast %cst_6 : f32 to vector<8x128xf32>
    %9 = arith.maximumf %7, %8 : vector<8x128xf32>
    %10 = vector.extract_strided_slice %4 {offsets = [8, 0], sizes = [64, 128], strides = [1, 1]} : vector<72x128xf32> to vector<64x128xf32>
    %11 = vector.broadcast %1 : vector<1x128xf32> to vector<64x128xf32>
    %12 = arith.addf %10, %11 : vector<64x128xf32>
    %c0_7 = arith.constant 0 : index
    %c0_8 = arith.constant 0 : index
    %13 = vector.load %arg2[%c0_7, %c0_8] : memref<128x128xf32, #tpu.memory_space<vmem>>, vector<128x128xf32>
    %14 = vector.extract_strided_slice %12 {offsets = [0, 0], sizes = [8, 128], strides = [1, 1]} : vector<64x128xf32> to vector<8x128xf32>
    %cst_9 = arith.constant dense<0.000000e+00> : vector<8x128xf32>
    %15 = tpu.matmul %9, %13, %cst_9 {dimension_numbers = #tpu.dot_dimension_numbers<[1], [0], [0], [1], [0, 0, 1, 1], [], []>} : vector<8x128xf32>, vector<128x128xf32>, vector<8x128xf32> -> vector<8x128xf32>
    %16 = arith.addf %14, %15 : vector<8x128xf32>
    %17 = math.tanh %16 : vector<8x128xf32>
    %18 = vector.extract_strided_slice %12 {offsets = [8, 0], sizes = [8, 128], strides = [1, 1]} : vector<64x128xf32> to vector<8x128xf32>
    %cst_10 = arith.constant dense<0.000000e+00> : vector<8x128xf32>
    %19 = tpu.matmul %17, %13, %cst_10 {dimension_numbers = #tpu.dot_dimension_numbers<[1], [0], [0], [1], [0, 0, 1, 1], [], []>} : vector<8x128xf32>, vector<128x128xf32>, vector<8x128xf32> -> vector<8x128xf32>
    %20 = arith.addf %18, %19 : vector<8x128xf32>
    %21 = math.tanh %20 : vector<8x128xf32>
    %22 = vector.extract_strided_slice %12 {offsets = [16, 0], sizes = [8, 128], strides = [1, 1]} : vector<64x128xf32> to vector<8x128xf32>
    %cst_11 = arith.constant dense<0.000000e+00> : vector<8x128xf32>
    %23 = tpu.matmul %21, %13, %cst_11 {dimension_numbers = #tpu.dot_dimension_numbers<[1], [0], [0], [1], [0, 0, 1, 1], [], []>} : vector<8x128xf32>, vector<128x128xf32>, vector<8x128xf32> -> vector<8x128xf32>
    %24 = arith.addf %22, %23 : vector<8x128xf32>
    %25 = math.tanh %24 : vector<8x128xf32>
    %26 = vector.extract_strided_slice %12 {offsets = [24, 0], sizes = [8, 128], strides = [1, 1]} : vector<64x128xf32> to vector<8x128xf32>
    %cst_12 = arith.constant dense<0.000000e+00> : vector<8x128xf32>
    %27 = tpu.matmul %25, %13, %cst_12 {dimension_numbers = #tpu.dot_dimension_numbers<[1], [0], [0], [1], [0, 0, 1, 1], [], []>} : vector<8x128xf32>, vector<128x128xf32>, vector<8x128xf32> -> vector<8x128xf32>
    %28 = arith.addf %26, %27 : vector<8x128xf32>
    %29 = math.tanh %28 : vector<8x128xf32>
    %30 = vector.extract_strided_slice %12 {offsets = [32, 0], sizes = [8, 128], strides = [1, 1]} : vector<64x128xf32> to vector<8x128xf32>
    %cst_13 = arith.constant dense<0.000000e+00> : vector<8x128xf32>
    %31 = tpu.matmul %29, %13, %cst_13 {dimension_numbers = #tpu.dot_dimension_numbers<[1], [0], [0], [1], [0, 0, 1, 1], [], []>} : vector<8x128xf32>, vector<128x128xf32>, vector<8x128xf32> -> vector<8x128xf32>
    %32 = arith.addf %30, %31 : vector<8x128xf32>
    %33 = math.tanh %32 : vector<8x128xf32>
    %34 = vector.extract_strided_slice %12 {offsets = [40, 0], sizes = [8, 128], strides = [1, 1]} : vector<64x128xf32> to vector<8x128xf32>
    %cst_14 = arith.constant dense<0.000000e+00> : vector<8x128xf32>
    %35 = tpu.matmul %33, %13, %cst_14 {dimension_numbers = #tpu.dot_dimension_numbers<[1], [0], [0], [1], [0, 0, 1, 1], [], []>} : vector<8x128xf32>, vector<128x128xf32>, vector<8x128xf32> -> vector<8x128xf32>
    %36 = arith.addf %34, %35 : vector<8x128xf32>
    %37 = math.tanh %36 : vector<8x128xf32>
    %38 = vector.extract_strided_slice %12 {offsets = [48, 0], sizes = [8, 128], strides = [1, 1]} : vector<64x128xf32> to vector<8x128xf32>
    %cst_15 = arith.constant dense<0.000000e+00> : vector<8x128xf32>
    %39 = tpu.matmul %37, %13, %cst_15 {dimension_numbers = #tpu.dot_dimension_numbers<[1], [0], [0], [1], [0, 0, 1, 1], [], []>} : vector<8x128xf32>, vector<128x128xf32>, vector<8x128xf32> -> vector<8x128xf32>
    %40 = arith.addf %38, %39 : vector<8x128xf32>
    %41 = math.tanh %40 : vector<8x128xf32>
    %42 = vector.extract_strided_slice %12 {offsets = [56, 0], sizes = [8, 128], strides = [1, 1]} : vector<64x128xf32> to vector<8x128xf32>
    %cst_16 = arith.constant dense<0.000000e+00> : vector<8x128xf32>
    %43 = tpu.matmul %41, %13, %cst_16 {dimension_numbers = #tpu.dot_dimension_numbers<[1], [0], [0], [1], [0, 0, 1, 1], [], []>} : vector<8x128xf32>, vector<128x128xf32>, vector<8x128xf32> -> vector<8x128xf32>
    %44 = arith.addf %42, %43 : vector<8x128xf32>
    %45 = math.tanh %44 : vector<8x128xf32>
    %cst_17 = arith.constant 0.000000e+00 : f32
    %46 = vector.broadcast %cst_17 : f32 to vector<8x128xf32>
    %47 = arith.maximumf %45, %46 : vector<8x128xf32>
    %c0_18 = arith.constant 0 : index
    %c0_19 = arith.constant 0 : index
    %48 = vector.load %arg3[%c0_18, %c0_19] : memref<1x128xf32, #tpu.memory_space<vmem>>, vector<1x128xf32>
    %49 = vector.broadcast %48 : vector<1x128xf32> to vector<8x128xf32>
    %50 = arith.mulf %47, %49 : vector<8x128xf32>
    %cst_20 = arith.constant dense<0.000000e+00> : vector<8xf32>
    %51 = vector.multi_reduction <add>, %50, %cst_20 [1] : vector<8x128xf32> to vector<8xf32>
    %52 = vector.shape_cast %51 : vector<8xf32> to vector<8x1xf32>
    %53 = vector.extract_strided_slice %52 {offsets = [0, 0], sizes = [2, 1], strides = [1, 1]} : vector<8x1xf32> to vector<2x1xf32>
    %c2 = arith.constant 2 : index
    %c0_21 = arith.constant 0 : index
    %54 = vector.load %arg4[%c2, %c0_21] : memref<3x128xf32, #tpu.memory_space<vmem>>, vector<1x1xf32>
    %55 = vector.broadcast %54 : vector<1x1xf32> to vector<2x1xf32>
    %56 = arith.addf %53, %55 : vector<2x1xf32>
    %c0_22 = arith.constant 0 : index
    %c0_23 = arith.constant 0 : index
    %57 = vector.load %arg5[%c0_22, %c0_23] : memref<2x1xf32, #tpu.memory_space<vmem>>, vector<2x1xf32>
    tpu.vector_store %arg5[%c0_22, %c0_23], %56 {strides = array<i32>} : memref<2x1xf32, #tpu.memory_space<vmem>>, vector<2x1xf32>,
    return
  }
}

</mosaic_0001>

<llo_original>
// kernel: critic_forward.1
$region0: #{critic_forward.1}
  #allocation0 [shape = 'u32[]', space=smem, size = 0x4, offset = 0x4, fixed_abs, tag = 'smem constant byte address 0x4 - core index']
  #allocation1 [shape = 'u32[72,128]{1,0:T(1,128)}', space=vmem, size = 0x9000, scoped, tag = 'internal scratch']
  %s0 = inlined_call_operand.vmem [shape: f32[72,16], index: 0, kind: input, shape index: {}]
  %s1 = inlined_call_operand.vmem [shape: f32[16,128], index: 1, kind: input, shape index: {}]
  %s2 = inlined_call_operand.vmem [shape: f32[128,128], index: 2, kind: input, shape index: {}]
  %s3 = inlined_call_operand.vmem [shape: f32[1,128], index: 3, kind: input, shape index: {}]
  %s4 = inlined_call_operand.vmem [shape: f32[3,128], index: 4, kind: input, shape index: {}]
  %s5 = inlined_call_operand.vmem [shape: f32[2,1], index: 5, kind: output, shape index: {}]
  %s6 = sld [smem:[#allocation0]]
  $region30: #{critic_forward.1} parent=0
    _
  %s8 = ssub.s32 1, %s6
  %s9 = scalar_select 0, %s8, %s6
  // Predicated region
  $region2: #{critic_forward.1} parent=0 // pred_check
    _
  $region3: #{critic_forward.1} parent=0 // pred_check_branch
    %11 = sbr.rel (0) target = $region5
  $region4: #{critic_forward.1} parent=0 // pred_region
    _
  $region5: #{critic_forward.1} parent=0 // pred_fallthru
    _
  // Predicated region
  $region6: #{critic_forward.1} parent=0 // pred_check
    _
  $region7: #{critic_forward.1} parent=0 // pred_check_branch
    %13 = sbr.rel (0) target = $region9
  $region8: #{critic_forward.1} parent=0 // pred_region
    _
  $region9: #{critic_forward.1} parent=0 // pred_fallthru
    _
  // Predicated region
  $region10: #{critic_forward.1} parent=0 // pred_check
    _
  $region11: #{critic_forward.1} parent=0 // pred_check_branch
    %15 = sbr.rel (0) target = $region13
  $region12: #{critic_forward.1} parent=0 // pred_region
    _
  $region13: #{critic_forward.1} parent=0 // pred_fallthru
    _
  // Predicated region
  $region14: #{critic_forward.1} parent=0 // pred_check
    _
  $region15: #{critic_forward.1} parent=0 // pred_check_branch
    %17 = sbr.rel (0) target = $region17
  $region16: #{critic_forward.1} parent=0 // pred_region
    _
  $region17: #{critic_forward.1} parent=0 // pred_fallthru
    _
  // Predicated region
  $region18: #{critic_forward.1} parent=0 // pred_check
    _
  $region19: #{critic_forward.1} parent=0 // pred_check_branch
    %19 = sbr.rel (0) target = $region21
  $region20: #{critic_forward.1} parent=0 // pred_region
    _
  $region21: #{critic_forward.1} parent=0 // pred_fallthru
    _
  %v20 = vld [vmem:[%s4] sm:$0x1]
  %v21 = vld [vmem:[%s4 + $0x1] sm:$0x1]
  %v22 = vld [vmem:[%s0] sm:$0xff]
  %v23 = vld [vmem:[%s0 + $0x8] sm:$0xff]
  %v24 = vld [vmem:[%s0 + $0x10] sm:$0xff]
  %v25 = vld [vmem:[%s0 + $0x18] sm:$0xff]
  %v26 = vld [vmem:[%s0 + $0x20] sm:$0xff]
  %v27 = vld [vmem:[%s0 + $0x28] sm:$0xff]
  %v28 = vld [vmem:[%s0 + $0x30] sm:$0xff]
  %v29 = vld [vmem:[%s0 + $0x38] sm:$0xff]
  %v30 = vld [vmem:[%s0 + $0x40] sm:$0xff]
  %v31 = vld [vmem:[%s1] sm:$0xff]
  %v32 = vld [vmem:[%s1 + $0x8] sm:$0xff]
  %vm33 = vcmask 130048
  %v35 = vsel %vm33, %v22, 0
  %v38 = vsel %vm33, %v23, 0
  %v41 = vsel %vm33, %v24, 0
  %v44 = vsel %vm33, %v25, 0
  %v47 = vsel %vm33, %v26, 0
  %v50 = vsel %vm33, %v27, 0
  %v53 = vsel %vm33, %v28, 0
  %v56 = vsel %vm33, %v29, 0
  %v59 = vsel %vm33, %v30, 0
  %61 = vmatpush.msra.mxu0 0.0
  %62 = vmatpush.msra.mxu0 0.0
  %63 = vmatpush.msra.mxu0 0.0
  %64 = vmatpush.msra.mxu0 0.0
  %65 = vmatpush.msra.mxu0 0.0
  %66 = vmatpush.msra.mxu0 0.0
  %67 = vmatpush.msra.mxu0 0.0
  %68 = vmatpush.msra.mxu0 0.0
  %69 = vmatpush.msra.mxu0 0.0
  %70 = vmatpush.msra.mxu0 0.0
  %71 = vmatpush.msra.mxu0 0.0
  %72 = vmatpush.msra.mxu0 0.0
  %73 = vmatpush.msra.mxu0 0.0
  %74 = vmatpush.msra.mxu0 0.0
  %75 = vmatpush.msra.mxu0 %v32
  %76 = vmatpush.msra.mxu0 %v31
  %77 = vmatmul.f32.gmra.mxu0 %v35
  %v78 = vpop.f32.mrf.mxu0
  %v79 = vadd.f32 0.0, %v78
  %80 = vmatmul.f32.gmra.mxu0 %v38
  %v81 = vpop.f32.mrf.mxu0
  %v82 = vadd.f32 0.0, %v81
  %83 = vmatmul.f32.gmra.mxu0 %v41
  %v84 = vpop.f32.mrf.mxu0
  %v85 = vadd.f32 0.0, %v84
  %86 = vmatmul.f32.gmra.mxu0 %v44
  %v87 = vpop.f32.mrf.mxu0
  %v88 = vadd.f32 0.0, %v87
  %89 = vmatmul.f32.gmra.mxu0 %v47
  %v90 = vpop.f32.mrf.mxu0
  %v91 = vadd.f32 0.0, %v90
  %92 = vmatmul.f32.gmra.mxu0 %v50
  %v93 = vpop.f32.mrf.mxu0
  %v94 = vadd.f32 0.0, %v93
  %95 = vmatmul.f32.gmra.mxu0 %v53
  %v96 = vpop.f32.mrf.mxu0
  %v97 = vadd.f32 0.0, %v96
  %98 = vmatmul.f32.gmra.mxu0 %v56
  %v99 = vpop.f32.mrf.mxu0
  %v100 = vadd.f32 0.0, %v99
  %101 = vmatmul.f32.gmra.mxu0 %v59
  %v102 = vpop.f32.mrf.mxu0
  %v103 = vadd.f32 0.0, %v102
  %104 = vdwg.mxu0
  %v105 = vperm.slane %v20, 0
  %v106 = vadd.f32 %v79, %v105
  %v107 = vmax.f32 %v106, 0.0
  %v108 = vperm.slane %v21, 0
  %v109 = vadd.f32 %v82, %v108
  %v110 = vadd.f32 %v85, %v108
  %v111 = vadd.f32 %v88, %v108
  %v112 = vadd.f32 %v91, %v108
  %v113 = vadd.f32 %v94, %v108
  %v114 = vadd.f32 %v97, %v108
  %v115 = vadd.f32 %v100, %v108
  %v116 = vadd.f32 %v103, %v108
  %v117 = vld [vmem:[%s2] sm:$0xff]
  %v118 = vld [vmem:[%s2 + $0x8] sm:$0xff]
  %v119 = vld [vmem:[%s2 + $0x10] sm:$0xff]
  %v120 = vld [vmem:[%s2 + $0x18] sm:$0xff]
  %v121 = vld [vmem:[%s2 + $0x20] sm:$0xff]
  %v122 = vld [vmem:[%s2 + $0x28] sm:$0xff]
  %v123 = vld [vmem:[%s2 + $0x30] sm:$0xff]
  %v124 = vld [vmem:[%s2 + $0x38] sm:$0xff]
  %v125 = vld [vmem:[%s2 + $0x40] sm:$0xff]
  %v126 = vld [vmem:[%s2 + $0x48] sm:$0xff]
  %v127 = vld [vmem:[%s2 + $0x50] sm:$0xff]
  %v128 = vld [vmem:[%s2 + $0x58] sm:$0xff]
  %v129 = vld [vmem:[%s2 + $0x60] sm:$0xff]
  %v130 = vld [vmem:[%s2 + $0x68] sm:$0xff]
  %v131 = vld [vmem:[%s2 + $0x70] sm:$0xff]
  %v132 = vld [vmem:[%s2 + $0x78] sm:$0xff]
  %133 = vmatpush.msra.mxu0 %v132
  %134 = vmatpush.msra.mxu0 %v131
  %135 = vmatpush.msra.mxu0 %v130
  %136 = vmatpush.msra.mxu0 %v129
  %137 = vmatpush.msra.mxu0 %v128
  %138 = vmatpush.msra.mxu0 %v127
  %139 = vmatpush.msra.mxu0 %v126
  %140 = vmatpush.msra.mxu0 %v125
  %141 = vmatpush.msra.mxu0 %v124
  %142 = vmatpush.msra.mxu0 %v123
  %143 = vmatpush.msra.mxu0 %v122
  %144 = vmatpush.msra.mxu0 %v121
  %145 = vmatpush.msra.mxu0 %v120
  %146 = vmatpush.msra.mxu0 %v119
  %147 = vmatpush.msra.mxu0 %v118
  %148 = vmatpush.msra.mxu0 %v117
  %149 = vmatmul.f32.gmra.mxu0 %v107
  %v150 = vpop.f32.mrf.mxu0
  %v151 = vadd.f32 0.0, %v150
  %152 = vdwg.mxu0
  %v153 = vadd.f32 %v109, %v151
  %v154 = vtanh.pop %v153
  %155 = vmatpush.msra.mxu0 %v132
  %156 = vmatpush.msra.mxu0 %v131
  %157 = vmatpush.msra.mxu0 %v130
  %158 = vmatpush.msra.mxu0 %v129
  %159 = vmatpush.msra.mxu0 %v128
  %160 = vmatpush.msra.mxu0 %v127
  %161 = vmatpush.msra.mxu0 %v126
  %162 = vmatpush.msra.mxu0 %v125
  %163 = vmatpush.msra.mxu0 %v124
  %164 = vmatpush.msra.mxu0 %v123
  %165 = vmatpush.msra.mxu0 %v122
  %166 = vmatpush.msra.mxu0 %v121
  %167 = vmatpush.msra.mxu0 %v120
  %168 = vmatpush.msra.mxu0 %v119
  %169 = vmatpush.msra.mxu0 %v118
  %170 = vmatpush.msra.mxu0 %v117
  %171 = vmatmul.f32.gmra.mxu0 %v154
  %v172 = vpop.f32.mrf.mxu0
  %v173 = vadd.f32 0.0, %v172
  %174 = vdwg.mxu0
  %v175 = vadd.f32 %v110, %v173
  %v176 = vtanh.pop %v175
  %177 = vmatpush.msra.mxu0 %v132
  %178 = vmatpush.msra.mxu0 %v131
  %179 = vmatpush.msra.mxu0 %v130
  %180 = vmatpush.msra.mxu0 %v129
  %181 = vmatpush.msra.mxu0 %v128
  %182 = vmatpush.msra.mxu0 %v127
  %183 = vmatpush.msra.mxu0 %v126
  %184 = vmatpush.msra.mxu0 %v125
  %185 = vmatpush.msra.mxu0 %v124
  %186 = vmatpush.msra.mxu0 %v123
  %187 = vmatpush.msra.mxu0 %v122
  %188 = vmatpush.msra.mxu0 %v121
  %189 = vmatpush.msra.mxu0 %v120
  %190 = vmatpush.msra.mxu0 %v119
  %191 = vmatpush.msra.mxu0 %v118
  %192 = vmatpush.msra.mxu0 %v117
  %193 = vmatmul.f32.gmra.mxu0 %v176
  %v194 = vpop.f32.mrf.mxu0
  %v195 = vadd.f32 0.0, %v194
  %196 = vdwg.mxu0
  %v197 = vadd.f32 %v111, %v195
  %v198 = vtanh.pop %v197
  %199 = vmatpush.msra.mxu0 %v132
  %200 = vmatpush.msra.mxu0 %v131
  %201 = vmatpush.msra.mxu0 %v130
  %202 = vmatpush.msra.mxu0 %v129
  %203 = vmatpush.msra.mxu0 %v128
  %204 = vmatpush.msra.mxu0 %v127
  %205 = vmatpush.msra.mxu0 %v126
  %206 = vmatpush.msra.mxu0 %v125
  %207 = vmatpush.msra.mxu0 %v124
  %208 = vmatpush.msra.mxu0 %v123
  %209 = vmatpush.msra.mxu0 %v122
  %210 = vmatpush.msra.mxu0 %v121
  %211 = vmatpush.msra.mxu0 %v120
  %212 = vmatpush.msra.mxu0 %v119
  %213 = vmatpush.msra.mxu0 %v118
  %214 = vmatpush.msra.mxu0 %v117
  %215 = vmatmul.f32.gmra.mxu0 %v198
  %v216 = vpop.f32.mrf.mxu0
  %v217 = vadd.f32 0.0, %v216
  %218 = vdwg.mxu0
  %v219 = vadd.f32 %v112, %v217
  %v220 = vtanh.pop %v219
  %221 = vmatpush.msra.mxu0 %v132
  %222 = vmatpush.msra.mxu0 %v131
  %223 = vmatpush.msra.mxu0 %v130
  %224 = vmatpush.msra.mxu0 %v129
  %225 = vmatpush.msra.mxu0 %v128
  %226 = vmatpush.msra.mxu0 %v127
  %227 = vmatpush.msra.mxu0 %v126
  %228 = vmatpush.msra.mxu0 %v125
  %229 = vmatpush.msra.mxu0 %v124
  %230 = vmatpush.msra.mxu0 %v123
  %231 = vmatpush.msra.mxu0 %v122
  %232 = vmatpush.msra.mxu0 %v121
  %233 = vmatpush.msra.mxu0 %v120
  %234 = vmatpush.msra.mxu0 %v119
  %235 = vmatpush.msra.mxu0 %v118
  %236 = vmatpush.msra.mxu0 %v117
  %237 = vmatmul.f32.gmra.mxu0 %v220
  %v238 = vpop.f32.mrf.mxu0
  %v239 = vadd.f32 0.0, %v238
  %240 = vdwg.mxu0
  %v241 = vadd.f32 %v113, %v239
  %v242 = vtanh.pop %v241
  %243 = vmatpush.msra.mxu0 %v132
  %244 = vmatpush.msra.mxu0 %v131
  %245 = vmatpush.msra.mxu0 %v130
  %246 = vmatpush.msra.mxu0 %v129
  %247 = vmatpush.msra.mxu0 %v128
  %248 = vmatpush.msra.mxu0 %v127
  %249 = vmatpush.msra.mxu0 %v126
  %250 = vmatpush.msra.mxu0 %v125
  %251 = vmatpush.msra.mxu0 %v124
  %252 = vmatpush.msra.mxu0 %v123
  %253 = vmatpush.msra.mxu0 %v122
  %254 = vmatpush.msra.mxu0 %v121
  %255 = vmatpush.msra.mxu0 %v120
  %256 = vmatpush.msra.mxu0 %v119
  %257 = vmatpush.msra.mxu0 %v118
  %258 = vmatpush.msra.mxu0 %v117
  %259 = vmatmul.f32.gmra.mxu0 %v242
  %v260 = vpop.f32.mrf.mxu0
  %v261 = vadd.f32 0.0, %v260
  %262 = vdwg.mxu0
  %v263 = vadd.f32 %v114, %v261
  %v264 = vtanh.pop %v263
  %265 = vmatpush.msra.mxu0 %v132
  %266 = vmatpush.msra.mxu0 %v131
  %267 = vmatpush.msra.mxu0 %v130
  %268 = vmatpush.msra.mxu0 %v129
  %269 = vmatpush.msra.mxu0 %v128
  %270 = vmatpush.msra.mxu0 %v127
  %271 = vmatpush.msra.mxu0 %v126
  %272 = vmatpush.msra.mxu0 %v125
  %273 = vmatpush.msra.mxu0 %v124
  %274 = vmatpush.msra.mxu0 %v123
  %275 = vmatpush.msra.mxu0 %v122
  %276 = vmatpush.msra.mxu0 %v121
  %277 = vmatpush.msra.mxu0 %v120
  %278 = vmatpush.msra.mxu0 %v119
  %279 = vmatpush.msra.mxu0 %v118
  %280 = vmatpush.msra.mxu0 %v117
  %281 = vmatmul.f32.gmra.mxu0 %v264
  %v282 = vpop.f32.mrf.mxu0
  %v283 = vadd.f32 0.0, %v282
  %284 = vdwg.mxu0
  %v285 = vadd.f32 %v115, %v283
  %v286 = vtanh.pop %v285
  %287 = vmatpush.msra.mxu0 %v132
  %288 = vmatpush.msra.mxu0 %v131
  %289 = vmatpush.msra.mxu0 %v130
  %290 = vmatpush.msra.mxu0 %v129
  %291 = vmatpush.msra.mxu0 %v128
  %292 = vmatpush.msra.mxu0 %v127
  %293 = vmatpush.msra.mxu0 %v126
  %294 = vmatpush.msra.mxu0 %v125
  %295 = vmatpush.msra.mxu0 %v124
  %296 = vmatpush.msra.mxu0 %v123
  %297 = vmatpush.msra.mxu0 %v122
  %298 = vmatpush.msra.mxu0 %v121
  %299 = vmatpush.msra.mxu0 %v120
  %300 = vmatpush.msra.mxu0 %v119
  %301 = vmatpush.msra.mxu0 %v118
  %302 = vmatpush.msra.mxu0 %v117
  %303 = vmatmul.f32.gmra.mxu0 %v286
  %v304 = vpop.f32.mrf.mxu0
  %v305 = vadd.f32 0.0, %v304
  %306 = vdwg.mxu0
  %v307 = vadd.f32 %v116, %v305
  %v308 = vtanh.pop %v307
  %v309 = vmax.f32 %v308, 0.0
  %v310 = vld [vmem:[%s3] sm:$0x1]
  %v312 = vperm.slane %v310, 0
  %v314 = vmul.f32 %v309, %v312
  %315 = vadd.xlane.f32.xlu0 %v314
  %v316 = vpop.xlane.xlu0 %315
  %v317 = vld [vmem:[%s4 + $0x2] sm:$0x1]
  %v318 = vperm.slane %v317, 0
  %v319 = vadd.f32 %v316, %v318
  %vm320 = vcmask 1024
  %321 = vst.msk [vmem:[%s5] sm:$0x3] %vm320, %v319
  // Predicated region
  $region22: #{critic_forward.1} parent=0 // pred_check
    _
  $region23: #{critic_forward.1} parent=0 // pred_check_branch
    %323 = sbr.rel (0) target = $region25
  $region24: #{critic_forward.1} parent=0 // pred_region
    _
  $region25: #{critic_forward.1} parent=0 // pred_fallthru
    _
  // Predicated region
  $region26: #{critic_forward.1} parent=0 // pred_check
    _
  $region27: #{critic_forward.1} parent=0 // pred_check_branch
    %325 = sbr.rel (0) target = $region29
  $region28: #{critic_forward.1} parent=0 // pred_region
    _
  $region29: #{critic_forward.1} parent=0 // pred_fallthru
    _

</llo_original>
